<compile_context>
chip_gen: v7x
topology: tpu7x:2x2x1
jax: 0.10.0
libtpu: 0.0.40
codegen_flags: <defaults>
</compile_context>

<pallas_src>
import functools

import jax
import jax.numpy as jnp
from jax.experimental import pallas as pl
from jax.experimental.pallas import tpu as pltpu

_MIB = 1024 * 1024


# ---------------------------------------------------------------------------
# Kernel
# ---------------------------------------------------------------------------
def _rmsnorm_kernel(x_ref, w_ref, o_ref, *, eps):
    # x_ref: (row_tile, hidden) block; w_ref: (1, hidden) in the weight's own
    # dtype; o_ref: (row_tile, hidden) in the promoted output dtype.
    x = x_ref[...].astype(jnp.float32)
    variance = jnp.mean(x * x, axis=-1, keepdims=True)
    inv = jax.lax.rsqrt(variance + eps)                 # EUP rsqrt (free slot)
    normed = (x * inv).astype(x_ref.dtype)              # `.to(input_dtype)` in torch
    # `weight * normed` promotes exactly like the PyTorch module
    # (`self.weight * hidden_states.to(input_dtype)`).
    o_ref[...] = (w_ref[...] * normed).astype(o_ref.dtype)


# ---------------------------------------------------------------------------
# Tiling heuristics
# ---------------------------------------------------------------------------
def _round_up(x: int, m: int) -> int:
    return ((x + m - 1) // m) * m


def _sublane_multiple(dtype) -> int:
    """Sublane packing multiple: 8 for f32, 16 for bf16, 32 for int8."""
    itemsize = jnp.dtype(dtype).itemsize
    return max(8, 32 // itemsize)


def _vmem_budget_and_limit():
    """Generation-aware (tile budget, vmem_limit_bytes)."""
    cap = None
    try:
        cap = int(getattr(pltpu.get_tpu_info(), "vmem_capacity_bytes", 0)) or None
    except Exception:
        cap = None
    if cap is not None and cap >= 100 * _MIB:
        # 128 MiB-VMEM parts (v5e / v6e): big budget keeps >=512-row tiles
        # even for very large hidden (8K-16K).
        return 80 * _MIB, 100 * _MIB
    # 64 MiB parts (v7x) or unknown generation: conservative limit leaves
    # headroom for Mosaic internal scratch / DMA descriptors / weight buffer.
    return 32 * _MIB, 44 * _MIB


def _pick_row_tile(rows: int, hidden: int, in_dtype, out_dtype,
                   vmem_budget_bytes: int) -> int:
    """Largest sublane-aligned row tile whose double-buffered in+out blocks
    fit the VMEM budget, capped at the ~512-1024-row roofline plateau and
    split so the grid has >=2 blocks when rows allow (v7x megacore)."""
    sub = _sublane_multiple(in_dtype)
    bytes_per_row = hidden * 2 * (jnp.dtype(in_dtype).itemsize
                                  + jnp.dtype(out_dtype).itemsize)
    tile = vmem_budget_bytes // max(bytes_per_row, 1)
    tile = max(sub, (tile // sub) * sub)          # sublane-aligned, >= packing
    tile = min(tile, 1024)                        # diminishing returns past ~1K rows
    rows_up = _round_up(rows, sub)
    tile = min(tile, rows_up)
    # Guarantee >= 2 grid blocks when rows allow, so ("parallel",) can shard
    # the row axis across both TensorCores on v7x.
    if rows_up >= 2 * sub:
        tile = min(tile, _round_up(pl.cdiv(rows_up, 2), sub))
    return int(tile)


# ---------------------------------------------------------------------------
# Pure-JAX path (reference + fallback for lane-sparse hidden sizes)
# ---------------------------------------------------------------------------
def bitnet_rmsnorm_ref(hidden_states, weight, eps=1e-6):
    """Mirrors the PyTorch module exactly (including type promotion)."""
    input_dtype = hidden_states.dtype
    x = hidden_states.astype(jnp.float32)
    variance = jnp.mean(x * x, axis=-1, keepdims=True)
    x = x * jax.lax.rsqrt(variance + eps)
    return weight * x.astype(input_dtype)


# ---------------------------------------------------------------------------
# Wrapper
# ---------------------------------------------------------------------------
def bitnet_rmsnorm(hidden_states, weight, eps=1e-6, row_tile=None,
                   in_place=False):
    """RMSNorm over the last axis. hidden_states: (..., hidden)."""
    orig_shape = hidden_states.shape
    hidden = orig_shape[-1]
    in_dtype = hidden_states.dtype
    # Output dtype follows PyTorch promotion of `weight * hs.to(input_dtype)`.
    out_dtype = jnp.result_type(weight.dtype, in_dtype)

    # Lane-density guard: hidden not a multiple of 128 (esp. < 128) would
    # generate masked partial stores and >=4x vreg/DMA padding waste; the
    # plain-XLA path is better there.
    if hidden % 128 != 0:
        return bitnet_rmsnorm_ref(hidden_states, weight, eps=eps)

    x2d = hidden_states.reshape(-1, hidden)
    rows = x2d.shape[0]
    w2d = weight.reshape(1, hidden)               # keep weight in its own dtype

    vmem_budget, vmem_limit = _vmem_budget_and_limit()
    if row_tile is None:
        row_tile = _pick_row_tile(rows, hidden, in_dtype, out_dtype, vmem_budget)

    kernel = functools.partial(_rmsnorm_kernel, eps=eps)
    grid = (pl.cdiv(rows, row_tile),)             # partial last block is masked;
                                                  # per-row norm => padded rows inert

    # Optional in-place: halves the HBM footprint when the caller donates x.
    aliases = {0: 0} if (in_place and out_dtype == in_dtype) else {}

    # TODO(synk): if profiling ever shows exposed DMA for shapes that force
    # small row tiles (very large hidden), set pipeline_mode=pl.Buffered(3)
    # on the activation BlockSpec.
    out = pl.pallas_call(
        kernel,
        out_shape=jax.ShapeDtypeStruct((rows, hidden), out_dtype),
        grid_spec=pltpu.PrefetchScalarGridSpec(
            num_scalar_prefetch=0,
            grid=grid,
            in_specs=[
                pl.BlockSpec((row_tile, hidden), lambda i: (i, 0)),
                pl.BlockSpec((1, hidden), lambda i: (0, 0)),
            ],
            out_specs=pl.BlockSpec((row_tile, hidden), lambda i: (i, 0)),
        ),
        compiler_params=pltpu.CompilerParams(
            dimension_semantics=("parallel",),    # shards rows across v7x TCs
            vmem_limit_bytes=vmem_limit,
        ),
        input_output_aliases=aliases,
    )(x2d, w2d)

    return out.reshape(orig_shape[:-1] + (hidden,))


# ---------------------------------------------------------------------------
# Tests
# ---------------------------------------------------------------------------
if __name__ == "__main__":
    key = jax.random.PRNGKey(0)

    # --- f32 test, lane-dense hidden, exercises the Pallas path ---
    batch, seq, hidden = 2, 8, 256
    x = jax.random.normal(key, (batch, seq, hidden), dtype=jnp.float32)
    weight = jnp.ones((hidden,), dtype=jnp.float32)   # module init: ones(hidden)

    out = jax.block_until_ready(bitnet_rmsnorm(x, weight, eps=1e-6))
    ref = bitnet_rmsnorm_ref(x, weight, eps=1e-6)
    assert out.shape == x.shape and out.dtype == jnp.float32
    assert jnp.allclose(out, ref, atol=1e-5, rtol=1e-5), "f32 mismatch vs reference"

    # --- bf16 activations + fp32 weight, non-divisible row count ---
    # PyTorch promotion: output dtype is fp32 (weight fp32 * bf16 normed).
    key2 = jax.random.PRNGKey(1)
    xb = jax.random.normal(key2, (3, 5, 128), dtype=jnp.bfloat16)
    wb = jnp.ones((128,), dtype=jnp.float32)
    outb = jax.block_until_ready(bitnet_rmsnorm(xb, wb, eps=1e-6))
    refb = bitnet_rmsnorm_ref(xb, wb, eps=1e-6)
    assert outb.shape == xb.shape and outb.dtype == refb.dtype == jnp.float32
    assert jnp.allclose(outb, refb, atol=2e-2, rtol=2e-2), "bf16 mismatch vs reference"

    # --- lane-sparse hidden (32): exercises the XLA fallback guard ---
    key3 = jax.random.PRNGKey(2)
    xs = jax.random.normal(key3, (2, 8, 32), dtype=jnp.float32)
    ws = jnp.ones((32,), dtype=jnp.float32)
    outs = jax.block_until_ready(bitnet_rmsnorm(xs, ws, eps=1e-6))
    refs = bitnet_rmsnorm_ref(xs, ws, eps=1e-6)
    assert outs.shape == xs.shape and jnp.allclose(outs, refs, atol=1e-5, rtol=1e-5)

    print("KERNEL_OK")
</pallas_src>

<mosaic_0001>
module attributes {stable_mosaic.version = 11 : i64} {
  func.func @_rmsnorm_kernel(%arg0: i32, %arg1: memref<8x256xf32, #tpu.memory_space<vmem>>, %arg2: memref<1x256xf32, #tpu.memory_space<vmem>>, %arg3: memref<8x256xf32, #tpu.memory_space<vmem>>) attributes {dimension_semantics = [#tpu.dimension_semantics<parallel>], iteration_bounds = array<i64: 2>, scalar_prefetch = 0 : i64, scratch_operands = 0 : i64, tpu.core_type = #tpu.core_type<tc>, window_params = [{transform_indices = @transform_0, window_bounds = array<i64: 8, 256>}, {pipeline_mode = #tpu.pipeline_mode<synchronous>, transform_indices = @transform_1, window_bounds = array<i64: 1, 256>}, {transform_indices = @transform_2, window_bounds = array<i64: 8, 256>}]} {
    %c0 = arith.constant 0 : index
    %c0_0 = arith.constant 0 : index
    %0 = vector.load %arg1[%c0, %c0_0] : memref<8x256xf32, #tpu.memory_space<vmem>>, vector<8x256xf32>
    %1 = arith.mulf %0, %0 : vector<8x256xf32>
    %cst = arith.constant dense<0.000000e+00> : vector<8xf32>
    %2 = vector.multi_reduction <add>, %1, %cst [1] : vector<8x256xf32> to vector<8xf32>
    %3 = vector.shape_cast %2 : vector<8xf32> to vector<8x1xf32>
    %cst_1 = arith.constant 2.560000e+02 : f32
    %4 = vector.broadcast %cst_1 : f32 to vector<8x1xf32>
    %5 = arith.divf %3, %4 : vector<8x1xf32>
    %cst_2 = arith.constant 9.99999997E-7 : f32
    %6 = vector.broadcast %cst_2 : f32 to vector<8x1xf32>
    %7 = arith.addf %5, %6 : vector<8x1xf32>
    %8 = math.rsqrt %7 : vector<8x1xf32>
    %9 = vector.broadcast %8 : vector<8x1xf32> to vector<8x256xf32>
    %10 = arith.mulf %0, %9 : vector<8x256xf32>
    %c0_3 = arith.constant 0 : index
    %c0_4 = arith.constant 0 : index
    %11 = vector.load %arg2[%c0_3, %c0_4] : memref<1x256xf32, #tpu.memory_space<vmem>>, vector<1x256xf32>
    %12 = vector.broadcast %11 : vector<1x256xf32> to vector<8x256xf32>
    %13 = arith.mulf %12, %10 : vector<8x256xf32>
    %c0_5 = arith.constant 0 : index
    %c0_6 = arith.constant 0 : index
    %14 = vector.load %arg3[%c0_5, %c0_6] : memref<8x256xf32, #tpu.memory_space<vmem>>, vector<8x256xf32>
    tpu.vector_store %arg3[%c0_5, %c0_6], %13 {strides = array<i32>} : memref<8x256xf32, #tpu.memory_space<vmem>>, vector<8x256xf32>,
    return
  }
  func.func @transform_0(%arg0: i32) -> (i32, i32) {
    %c0_i32 = arith.constant 0 : i32
    %c0_i32_0 = arith.constant 0 : i32
    return %arg0, %c0_i32 : i32, i32
  }
  func.func @transform_1(%arg0: i32) -> (i32, i32) {
    %c0_i32 = arith.constant 0 : i32
    %c0_i32_0 = arith.constant 0 : i32
    %c0_i32_1 = arith.constant 0 : i32
    return %c0_i32, %c0_i32_0 : i32, i32
  }
  func.func @transform_2(%arg0: i32) -> (i32, i32) {
    %c0_i32 = arith.constant 0 : i32
    %c0_i32_0 = arith.constant 0 : i32
    return %arg0, %c0_i32 : i32, i32
  }
}

</mosaic_0001>

<llo_original>
// kernel: tpu_custom_call.1
$region0: #{tpu_custom_call.1}
  #allocation0 [shape = 'u32[]', space=smem, size = 0x4, offset = 0x4, fixed_abs, tag = 'smem constant byte address 0x4 - core index']
  #allocation1 [shape = 'u32[144,128]{1,0:T(1,128)}', space=vmem, size = 0x12000, scoped, tag = 'internal scratch']
  %s0 = inlined_call_operand.hbm [shape: f32[16,256], index: 0, kind: input, shape index: {}]
  %s1 = inlined_call_operand.vmem [shape: f32[1,256], index: 1, kind: input, shape index: {}]
  %s2 = inlined_call_operand.hbm [shape: f32[16,256], index: 2, kind: output, shape index: {}]
  %s3 = sld [smem:[#allocation0]]
  $region45: #{tpu_custom_call.1} parent=0
    _
  %s5 = ssub.s32 1, %s3
  %s6 = scalar_select 0, %s5, %s3
  $region1: #{tpu_custom_call.1} parent=0
    #allocation2 [shape = 'u8[16384]{0}', space=vmem, size = 0x4000, scoped, tag = 'input window, operand 0']
    #allocation3 [shape = 's32[2]{0}', space=sflag, size = 0x8, scoped, tag = 'scoped memory for tpu_custom_call.1']
    #allocation4 [shape = 's32[2]{0}', space=sflag, size = 0x8, scoped, tag = 'scoped memory for tpu_custom_call.1']
    #allocation5 [shape = 'u8[16384]{0}', space=vmem, size = 0x4000, scoped, tag = 'output window, operand 0']
    %7 = vsyncpa [#allocation3], 0
    %s8 = scalar_lea.sflag [#allocation3], 1
    %9 = vsyncpa %s8, 0
    %10 = vsyncpa [#allocation4], 0
    %s11 = scalar_lea.sflag [#allocation4], 1
    %12 = vsyncpa %s11, 0
    loop: start=0, step=1, limit=4
    $region2: #{tpu_custom_call.1} parent=1 // loop_pre_header
      _
    $region3: #{tpu_custom_call.1} parent=1 // loop_header
      %s14 = sphi 0, %s18
      %p15 = scmp.ge.s32.totalorder %s14, 4
      %s24 = sphi 0, %s26
      %s27 = sphi 0, %s24
      %s28 = sphi 0, %s27
      %s44 = sphi 0, %s28
      %s48 = sphi 0, %s48
      %s50 = sphi 0, %s48
      %s51 = sphi 0, %s50
      %s65 = sphi 0, %s51
      %s71 = sphi 0, %s73
      %s74 = sphi 0, %s71
      %s75 = sphi 0, %s74
      %s91 = sphi 0, %s75
    $region4: #{tpu_custom_call.1} parent=1 // loop_header_branch
      %17 = sbr.rel (%p15) target = $region8
    $region5: #{tpu_custom_call.1} parent=1 // loop_body
      %s19 = ssub.s32 %s14, 1
      %s20 = ssub.s32 %s14, 2
      %s21 = sadd.s32 %s14, 1
      %s22 = ssub.s32 %s14, %s21
      %p23 = scmp.eq.s32.totalorder %s22, 0
      %s25 = sadd.s32 %s24, 1
      %s26 = scalar_select %p23, %s24, %s25
      %p29 = pneg %p23
      %p30 = scmp.eq.s32.totalorder %s14, 1
      %p31 = por %p29, %p30
      %p32 = scmp.ne.s32.totalorder %s24, %s27
      %p33 = scmp.eq.s32.totalorder %s14, 0
      %p34 = por %p32, %p33
      %p35 = scmp.ne.s32.totalorder %s24, %s27
      %p36 = scmp.eq.s32.totalorder %s19, 1
      %p37 = por %p35, %p36
      %p38 = scmp.ne.s32.totalorder %s27, %s28
      %p39 = scmp.eq.s32.totalorder %s19, 0
      %p40 = por %p38, %p39
      %p41 = scmp.ne.s32.totalorder %s27, %s28
      %p42 = scmp.eq.s32.totalorder %s20, 1
      %p43 = por %p41, %p42
      %p45 = scmp.ne.s32.totalorder %s28, %s44
      %p46 = scmp.eq.s32.totalorder %s20, 0
      %p47 = por %p45, %p46
      %s49 = sadd.s32 %s48, 1
      %p52 = scmp.eq.s32.totalorder %s14, 1
      %p53 = scmp.ne.s32.totalorder %s48, %s50
      %p54 = scmp.eq.s32.totalorder %s14, 0
      %p55 = por %p53, %p54
      %p56 = scmp.ne.s32.totalorder %s48, %s50
      %p57 = scmp.eq.s32.totalorder %s19, 1
      %p58 = por %p56, %p57
      %p59 = scmp.ne.s32.totalorder %s50, %s51
      %p60 = scmp.eq.s32.totalorder %s19, 0
      %p61 = por %p59, %p60
      %p62 = scmp.ne.s32.totalorder %s50, %s51
      %p63 = scmp.eq.s32.totalorder %s20, 1
      %p64 = por %p62, %p63
      %p66 = scmp.ne.s32.totalorder %s51, %s65
      %p67 = scmp.eq.s32.totalorder %s20, 0
      %p68 = por %p66, %p67
      %s69 = ssub.s32 %s14, %s21
      %p70 = scmp.eq.s32.totalorder %s69, 0
      %s72 = sadd.s32 %s71, 1
      %s73 = scalar_select %p70, %s71, %s72
      %p76 = pneg %p70
      %p77 = scmp.eq.s32.totalorder %s14, 1
      %p78 = por %p76, %p77
      %p79 = scmp.ne.s32.totalorder %s71, %s74
      %p80 = scmp.eq.s32.totalorder %s14, 0
      %p81 = por %p79, %p80
      %p82 = scmp.ne.s32.totalorder %s71, %s74
      %p83 = scmp.eq.s32.totalorder %s19, 1
      %p84 = por %p82, %p83
      %p85 = scmp.ne.s32.totalorder %s74, %s75
      %p86 = scmp.eq.s32.totalorder %s19, 0
      %p87 = por %p85, %p86
      %p88 = scmp.ne.s32.totalorder %s74, %s75
      %p89 = scmp.eq.s32.totalorder %s20, 1
      %p90 = por %p88, %p89
      %p92 = scmp.ne.s32.totalorder %s75, %s91
      %p93 = scmp.eq.s32.totalorder %s20, 0
      %p94 = por %p92, %p93
      %p95 = scmp.le.s32.totalorder 1, %s14
      %p96 = scmp.lt.s32.totalorder %s14, 3
      %p97 = pnand %p95, %p96
      %p98 = pneg %p97
      // Predicated region
      $region9: #{tpu_custom_call.1} parent=5 // pred_check
        _
      $region10: #{tpu_custom_call.1} parent=5 // pred_check_branch
        %100 = sbr.rel (%p97) target = $region12
      $region11: #{tpu_custom_call.1} parent=5 // pred_region
        %s101 = ssub.s32 %s14, 1
        // Predicated region
        $region13: #{tpu_custom_call.1} parent=11 // pred_check
          %p102 = pneg %p61
        $region14: #{tpu_custom_call.1} parent=11 // pred_check_branch
          %104 = sbr.rel (%p102) target = $region16
        $region15: #{tpu_custom_call.1} parent=11 // pred_region
          _
        $region16: #{tpu_custom_call.1} parent=11 // pred_fallthru
          _
      $region12: #{tpu_custom_call.1} parent=5 // pred_fallthru
        _
      %p105 = scmp.lt.s32.totalorder %s14, 2
      // Predicated region
      $region17: #{tpu_custom_call.1} parent=5 // pred_check
        %p106 = pneg %p105
      $region18: #{tpu_custom_call.1} parent=5 // pred_check_branch
        %108 = sbr.rel (%p106) target = $region20
      $region19: #{tpu_custom_call.1} parent=5 // pred_region
        // Predicated region
        $region21: #{tpu_custom_call.1} parent=19 // pred_check
          %p109 = pneg %p34
        $region22: #{tpu_custom_call.1} parent=19 // pred_check_branch
          %111 = sbr.rel (%p109) target = $region24
        $region23: #{tpu_custom_call.1} parent=19 // pred_region
          %s112 = sand.u32 %s24, 1
          %s113 = scalar_lea.sflag [#allocation3], %s112
          %s114 = sand.u32 %s24, 1
          %s115 = smul.addr %s114, 16
          %s116 = scalar_lea.vmem [#allocation2], %s115
          %s118 = ssub.s32 256, 256
          %119 = vsyncadd %s113, %s118
          %s120 = smul.addr %s14, 2
          %s121 = smul.addr %s120, 128
          %s122 = scalar_lea.hbm %s0, %s121
          %s124 = sshll.u32 %s116, 4
          %s125 = int_to_ptr.vmem [resolvable:$true] %s124
          %127 = dma.hbm_to_vmem [thread:$0]  %s122, 256, %s125, %s113
        $region24: #{tpu_custom_call.1} parent=19 // pred_fallthru
          _
      $region20: #{tpu_custom_call.1} parent=5 // pred_fallthru
        _
      %p128 = scmp.le.s32.totalorder 1, %s14
      %p129 = scmp.lt.s32.totalorder %s14, 3
      %p130 = pnand %p128, %p129
      %p131 = pneg %p130
      // Predicated region
      $region25: #{tpu_custom_call.1} parent=5 // pred_check
        _
      $region26: #{tpu_custom_call.1} parent=5 // pred_check_branch
        %133 = sbr.rel (%p130) target = $region28
      $region27: #{tpu_custom_call.1} parent=5 // pred_region
        %s134 = ssub.s32 %s14, 1
        %s135 = sand.u32 %s27, 1
        %s136 = scalar_lea.sflag [#allocation3], %s135
        %s137 = sand.u32 %s27, 1
        %s138 = smul.addr %s137, 16
        %s139 = scalar_lea.vmem [#allocation2], %s138
        // Predicated region
        $region29: #{tpu_custom_call.1} parent=27 // pred_check
          %p140 = pneg %p40
        $region30: #{tpu_custom_call.1} parent=27 // pred_check_branch
          %142 = sbr.rel (%p140) target = $region32
        $region31: #{tpu_custom_call.1} parent=27 // pred_region
          %143 = dma.done %s136, 256
        $region32: #{tpu_custom_call.1} parent=27 // pred_fallthru
          _
        %s144 = sand.u32 %s27, 1
        %s145 = scalar_lea.sflag [#allocation3], %s144
        %s146 = sand.u32 %s27, 1
        %s147 = smul.addr %s146, 16
        %s148 = scalar_lea.vmem [#allocation2], %s147
        %p149 = pneg %p40
        %p150 = pneg %p37
        %p151 = pneg %p61
        %p152 = pneg %p58
        %p153 = pneg %p87
        %p154 = pneg %p84
        %s155 = sand.u32 %s74, 1
        %s156 = scalar_lea.sflag [#allocation4], %s155
        %s157 = sand.u32 %s74, 1
        %s158 = smul.addr %s157, 16
        %s159 = scalar_lea.vmem [#allocation5], %s158
        %v160 = vld [vmem:[%s139] sm:$0xff]
        %v161 = vld [vmem:[%s139 + $0x8] sm:$0xff]
        %v162 = vmul.f32 %v160, %v160
        %v163 = vmul.f32 %v161, %v161
        %v164 = vadd.f32 %v162, %v163
        %165 = vadd.xlane.f32.xlu0 %v164
        %v166 = vpop.xlane.xlu0 %165
        %v167 = vrcp.pop 256.0
        %v168 = vmul.f32 %v166, %v167
        %v169 = vadd.f32 %v168, 1e-06
        %v170 = vrsqrt.pop %v169
        %v171 = vmul.f32 %v160, %v170
        %v172 = vmul.f32 %v161, %v170
        %v173 = vld [vmem:[%s1] sm:$0x3]
        %v175 = vlaneseq
        %v176 = vshrl.u32 %v175, 7
        %v177 = vsub.s32 0, %v176
        %v178 = vrot.slane %v173, %v177
        %v179 = vlaneseq
        %v180 = vshrl.u32 %v179, 7
        %v181 = vsub.s32 1, %v180
        %v182 = vrot.slane %v173, %v181
        %v185 = vmul.f32 %v178, %v171
        %v186 = vmul.f32 %v182, %v172
        %187 = vst [vmem:[%s159] sm:$0xff] %v185
        %188 = vst [vmem:[%s159 + $0x8] sm:$0xff] %v186
        %s189 = sand.u32 %s74, 1
        %s190 = scalar_lea.sflag [#allocation4], %s189
        %s191 = sand.u32 %s74, 1
        %s192 = smul.addr %s191, 16
        %s193 = scalar_lea.vmem [#allocation5], %s192
        // Predicated region
        $region33: #{tpu_custom_call.1} parent=27 // pred_check
          %p194 = pneg %p84
        $region34: #{tpu_custom_call.1} parent=27 // pred_check_branch
          %196 = sbr.rel (%p194) target = $region36
        $region35: #{tpu_custom_call.1} parent=27 // pred_region
          %s198 = ssub.s32 256, 256
          %199 = vsyncadd %s190, %s198
          %s200 = smul.addr %s19, 2
          %s201 = smul.addr %s200, 128
          %s202 = scalar_lea.hbm %s2, %s201
          %s204 = sshll.u32 %s193, 4
          %s205 = int_to_ptr.vmem [resolvable:$true] %s204
          %207 = dma.vmem_to_hbm [thread:$0]  %s205, 256, %s202, %s190
        $region36: #{tpu_custom_call.1} parent=27 // pred_fallthru
          _
      $region28: #{tpu_custom_call.1} parent=5 // pred_fallthru
        _
      %p208 = scmp.le.s32.totalorder 2, %s14
      // Predicated region
      $region37: #{tpu_custom_call.1} parent=5 // pred_check
        %p209 = pneg %p208
      $region38: #{tpu_custom_call.1} parent=5 // pred_check_branch
        %211 = sbr.rel (%p209) target = $region40
      $region39: #{tpu_custom_call.1} parent=5 // pred_region
        %s212 = ssub.s32 %s14, 2
        // Predicated region
        $region41: #{tpu_custom_call.1} parent=39 // pred_check
          %p213 = pneg %p90
        $region42: #{tpu_custom_call.1} parent=39 // pred_check_branch
          %215 = sbr.rel (%p213) target = $region44
        $region43: #{tpu_custom_call.1} parent=39 // pred_region
          %s216 = sand.u32 %s75, 1
          %s217 = scalar_lea.sflag [#allocation4], %s216
          %s218 = sand.u32 %s75, 1
          %s219 = smul.addr %s218, 16
          %s220 = scalar_lea.vmem [#allocation5], %s219
          %221 = dma.done %s217, 256
        $region44: #{tpu_custom_call.1} parent=39 // pred_fallthru
          _
      $region40: #{tpu_custom_call.1} parent=5 // pred_fallthru
        _
    $region6: #{tpu_custom_call.1} parent=1 // loop_footer
      %s18 = sadd.s32 1, %s14
    $region7: #{tpu_custom_call.1} parent=1 // loop_footer_branch
      %13 = sbr.rel target = $region3
    $region8: #{tpu_custom_call.1} parent=1 // loop_exit
      _
    %222 = vsyncpa [#allocation3], 1
    %s223 = scalar_lea.sflag [#allocation3], 1
    %224 = vsyncpa %s223, 1
    %225 = vsyncpa [#allocation4], 1
    %s226 = scalar_lea.sflag [#allocation4], 1
    %227 = vsyncpa %s226, 1

</llo_original>
